<compile_context>
chip_gen: v7x
topology: tpu7x:2x2x1
jax: 0.10.0
libtpu: 0.0.40
codegen_flags: <defaults>
</compile_context>

<pallas_src>
import functools

import jax
import jax.numpy as jnp
from jax.experimental import pallas as pl
from jax.experimental.pallas import tpu as pltpu

# ---------------------------------------------------------------------------
# Model configuration (matches the PyTorch MLP defaults)
# ---------------------------------------------------------------------------
INPUT_SIZE = 2
OUTPUT_SIZE = 2
HIDDEN = [4, 8, 16, 8, 4]
LEAKY_SLOPE = 0.01          # nn.LeakyReLU default negative_slope

FEAT_PAD = 128              # in-register lane width for hidden activations / weights
DEFAULT_BM = 512            # default batch tile (rows); multiple of 8


# ---------------------------------------------------------------------------
# Pallas kernel: the whole 6-layer MLP for one batch tile.
# Refs arrive as: x, w0, b0, w1, b1, ..., w5, b5, out
# ---------------------------------------------------------------------------
def mlp_kernel(*refs, num_layers, input_size, output_size):
    x_ref = refs[0]                                   # (bm, input_size)
    param_refs = refs[1:1 + 2 * num_layers]           # interleaved (w, b)
    o_ref = refs[1 + 2 * num_layers]                  # (bm, output_size)

    x = x_ref[...]                                    # (bm, input_size) f32

    # ---- Layer 0: contraction dim is tiny (2), do it on the VPU via broadcast
    # multiply-adds instead of padding activations to 128 lanes + MXU matmul.
    w0 = param_refs[0][...]                           # (input_size, FEAT_PAD)
    b0 = param_refs[1][...]                           # (1, FEAT_PAD)
    h = x[:, 0:1] * w0[0:1, :]                        # (bm,1)*(1,128) -> (bm,128)
    for c in range(1, input_size):
        h = h + x[:, c:c + 1] * w0[c:c + 1, :]
    h = h + b0
    h = jnp.where(h > 0, h, LEAKY_SLOPE * h)          # LeakyReLU(0.01)

    # ---- Layers 1 .. num_layers-1: lane-aligned MXU matmuls.
    for layer in range(1, num_layers):
        w = param_refs[2 * layer][...]                # (FEAT_PAD, FEAT_PAD)
        b = param_refs[2 * layer + 1][...]            # (1, FEAT_PAD) -> broadcasts
        h = jnp.dot(h, w, preferred_element_type=jnp.float32) + b
        if layer < num_layers - 1:
            h = jnp.where(h > 0, h, LEAKY_SLOPE * h)

    # Only the first `output_size` lanes carry real data.
    o_ref[...] = h[:, :output_size]


# ---------------------------------------------------------------------------
# Parameter init (PyTorch-style: U(-k, k), k = 1/sqrt(fan_in)), stored (in, out)
# ---------------------------------------------------------------------------
def init_params(key):
    dims = [INPUT_SIZE] + HIDDEN + [OUTPUT_SIZE]
    params = []
    for i in range(len(dims) - 1):
        fan_in, fan_out = dims[i], dims[i + 1]
        key, kw, kb = jax.random.split(key, 3)
        bound = 1.0 / jnp.sqrt(float(fan_in))
        w = jax.random.uniform(kw, (fan_in, fan_out), jnp.float32, -bound, bound)
        b = jax.random.uniform(kb, (fan_out,), jnp.float32, -bound, bound)
        params.append((w, b))
    return params


def _pad_to(x, shape):
    pads = [(0, t - s) for s, t in zip(x.shape, shape)]
    return jnp.pad(x, pads)


def _round_up(x, m):
    return ((x + m - 1) // m) * m


def _choose_bm(n, requested):
    """Batch tile: multiple of 8, no bigger than the padded batch, capped at
    `requested`. For small batches this yields a single grid step (lowest
    overhead); for large batches it yields multiple steps that the 'parallel'
    grid axis can shard across TensorCores."""
    n8 = _round_up(max(n, 1), 8)
    bm = min(_round_up(requested, 8), n8)
    return max(8, bm)


# ---------------------------------------------------------------------------
# Wrapper
# ---------------------------------------------------------------------------
@functools.partial(jax.jit, static_argnames=("bm",))
def mlp_forward(x, params, *, bm=DEFAULT_BM):
    """x: (N, INPUT_SIZE) f32 -> (N, OUTPUT_SIZE) f32."""
    n, in_dim = x.shape
    assert in_dim == INPUT_SIZE, in_dim

    bm = _choose_bm(n, bm)
    n_pad = _round_up(n, bm)

    x_p = x.astype(jnp.float32)
    if n_pad != n:
        x_p = jnp.pad(x_p, ((0, n_pad - n), (0, 0)))   # pad rows only (cheap)

    num_layers = len(params)

    # Weights padded to 128 lanes (grid-resident, <0.4 MiB total in VMEM).
    # Layer 0 keeps its tiny row count (it is consumed on the VPU).
    flat_params = []
    for layer, (w, b) in enumerate(params):
        rows = w.shape[0] if layer == 0 else FEAT_PAD
        flat_params.append(_pad_to(w, (rows, FEAT_PAD)))
        flat_params.append(_pad_to(b.reshape(1, -1), (1, FEAT_PAD)))

    grid = (n_pad // bm,)

    # Input / output blocks stay narrow (last dim == full array dim).
    in_specs = [pl.BlockSpec((bm, INPUT_SIZE), lambda i: (i, 0))]
    for layer in range(num_layers):
        rows = INPUT_SIZE if layer == 0 else FEAT_PAD
        in_specs.append(pl.BlockSpec((rows, FEAT_PAD), lambda i: (0, 0)))  # weight
        in_specs.append(pl.BlockSpec((1, FEAT_PAD), lambda i: (0, 0)))     # bias

    out = pl.pallas_call(
        functools.partial(
            mlp_kernel,
            num_layers=num_layers,
            input_size=INPUT_SIZE,
            output_size=OUTPUT_SIZE,
        ),
        out_shape=jax.ShapeDtypeStruct((n_pad, OUTPUT_SIZE), jnp.float32),
        grid_spec=pltpu.PrefetchScalarGridSpec(
            num_scalar_prefetch=0,
            grid=grid,
            in_specs=in_specs,
            out_specs=pl.BlockSpec((bm, OUTPUT_SIZE), lambda i: (i, 0)),
        ),
        compiler_params=pltpu.CompilerParams(
            dimension_semantics=("parallel",),
        ),
    )(x_p, *flat_params)

    return out[:n]


# ---------------------------------------------------------------------------
# Pure-JAX reference for correctness checking
# ---------------------------------------------------------------------------
def mlp_reference(x, params):
    h = x.astype(jnp.float32)
    for i, (w, b) in enumerate(params):
        h = h @ w + b
        if i < len(params) - 1:
            h = jnp.where(h > 0, h, LEAKY_SLOPE * h)
    return h


if __name__ == "__main__":
    key = jax.random.PRNGKey(0)
    key_p, key_x1, key_x2 = jax.random.split(key, 3)

    params = init_params(key_p)

    # Small batch (single grid step).
    n1 = 64
    x1 = jax.random.normal(key_x1, (n1, INPUT_SIZE), dtype=jnp.float32)
    y1 = mlp_forward(x1, params)
    jax.block_until_ready(y1)
    y1_ref = mlp_reference(x1, params)
    assert y1.shape == (n1, OUTPUT_SIZE), y1.shape
    assert jnp.allclose(y1, y1_ref, atol=1e-5, rtol=1e-5), (
        f"mismatch vs reference (n={n1}): "
        f"max abs err = {float(jnp.max(jnp.abs(y1 - y1_ref)))}"
    )

    # Odd batch (exercises row padding / masking path).
    n2 = 37
    x2 = jax.random.normal(key_x2, (n2, INPUT_SIZE), dtype=jnp.float32)
    y2 = mlp_forward(x2, params)
    jax.block_until_ready(y2)
    y2_ref = mlp_reference(x2, params)
    assert y2.shape == (n2, OUTPUT_SIZE), y2.shape
    assert jnp.allclose(y2, y2_ref, atol=1e-5, rtol=1e-5), (
        f"mismatch vs reference (n={n2}): "
        f"max abs err = {float(jnp.max(jnp.abs(y2 - y2_ref)))}"
    )

    # TODO(synk): the Diffusion reverse-sampling loop (beta schedule, noise
    # injection, per-step residual x - MLP([x, t])) is host-side control flow
    # around this MLP forward and is left in plain JAX.
    print("KERNEL_OK")
</pallas_src>

<mosaic_0001>
module attributes {stable_mosaic.version = 11 : i64} {
  func.func @mlp_kernel(%arg0: i32, %arg1: memref<64x2xf32, #tpu.memory_space<vmem>>, %arg2: memref<2x128xf32, #tpu.memory_space<vmem>>, %arg3: memref<1x128xf32, #tpu.memory_space<vmem>>, %arg4: memref<128x128xf32, #tpu.memory_space<vmem>>, %arg5: memref<1x128xf32, #tpu.memory_space<vmem>>, %arg6: memref<128x128xf32, #tpu.memory_space<vmem>>, %arg7: memref<1x128xf32, #tpu.memory_space<vmem>>, %arg8: memref<128x128xf32, #tpu.memory_space<vmem>>, %arg9: memref<1x128xf32, #tpu.memory_space<vmem>>, %arg10: memref<128x128xf32, #tpu.memory_space<vmem>>, %arg11: memref<1x128xf32, #tpu.memory_space<vmem>>, %arg12: memref<128x128xf32, #tpu.memory_space<vmem>>, %arg13: memref<1x128xf32, #tpu.memory_space<vmem>>, %arg14: memref<64x2xf32, #tpu.memory_space<vmem>>) attributes {dimension_semantics = [#tpu.dimension_semantics<parallel>], iteration_bounds = array<i64: 1>, scalar_prefetch = 0 : i64, scratch_operands = 0 : i64, tpu.core_type = #tpu.core_type<tc>, window_params = [{transform_indices = @transform_0, window_bounds = array<i64: 64, 2>}, {pipeline_mode = #tpu.pipeline_mode<synchronous>, transform_indices = @transform_1, window_bounds = array<i64: 2, 128>}, {pipeline_mode = #tpu.pipeline_mode<synchronous>, transform_indices = @transform_2, window_bounds = array<i64: 1, 128>}, {pipeline_mode = #tpu.pipeline_mode<synchronous>, transform_indices = @transform_3, window_bounds = array<i64: 128, 128>}, {pipeline_mode = #tpu.pipeline_mode<synchronous>, transform_indices = @transform_4, window_bounds = array<i64: 1, 128>}, {pipeline_mode = #tpu.pipeline_mode<synchronous>, transform_indices = @transform_5, window_bounds = array<i64: 128, 128>}, {pipeline_mode = #tpu.pipeline_mode<synchronous>, transform_indices = @transform_6, window_bounds = array<i64: 1, 128>}, {pipeline_mode = #tpu.pipeline_mode<synchronous>, transform_indices = @transform_7, window_bounds = array<i64: 128, 128>}, {pipeline_mode = #tpu.pipeline_mode<synchronous>, transform_indices = @transform_8, window_bounds = array<i64: 1, 128>}, {pipeline_mode = #tpu.pipeline_mode<synchronous>, transform_indices = @transform_9, window_bounds = array<i64: 128, 128>}, {pipeline_mode = #tpu.pipeline_mode<synchronous>, transform_indices = @transform_10, window_bounds = array<i64: 1, 128>}, {pipeline_mode = #tpu.pipeline_mode<synchronous>, transform_indices = @transform_11, window_bounds = array<i64: 128, 128>}, {pipeline_mode = #tpu.pipeline_mode<synchronous>, transform_indices = @transform_12, window_bounds = array<i64: 1, 128>}, {transform_indices = @transform_13, window_bounds = array<i64: 64, 2>}]} {
    %c0 = arith.constant 0 : index
    %c0_0 = arith.constant 0 : index
    %0 = vector.load %arg1[%c0, %c0_0] : memref<64x2xf32, #tpu.memory_space<vmem>>, vector<64x2xf32>
    %c0_1 = arith.constant 0 : index
    %c0_2 = arith.constant 0 : index
    %1 = vector.load %arg2[%c0_1, %c0_2] : memref<2x128xf32, #tpu.memory_space<vmem>>, vector<2x128xf32>
    %c0_3 = arith.constant 0 : index
    %c0_4 = arith.constant 0 : index
    %2 = vector.load %arg3[%c0_3, %c0_4] : memref<1x128xf32, #tpu.memory_space<vmem>>, vector<1x128xf32>
    %3 = vector.extract_strided_slice %0 {offsets = [0, 0], sizes = [64, 1], strides = [1, 1]} : vector<64x2xf32> to vector<64x1xf32>
    %4 = vector.extract_strided_slice %1 {offsets = [0, 0], sizes = [1, 128], strides = [1, 1]} : vector<2x128xf32> to vector<1x128xf32>
    %5 = vector.broadcast %3 : vector<64x1xf32> to vector<64x128xf32>
    %6 = vector.broadcast %4 : vector<1x128xf32> to vector<64x128xf32>
    %7 = arith.mulf %5, %6 : vector<64x128xf32>
    %8 = vector.extract_strided_slice %0 {offsets = [0, 1], sizes = [64, 1], strides = [1, 1]} : vector<64x2xf32> to vector<64x1xf32>
    %9 = vector.extract_strided_slice %1 {offsets = [1, 0], sizes = [1, 128], strides = [1, 1]} : vector<2x128xf32> to vector<1x128xf32>
    %10 = vector.broadcast %8 : vector<64x1xf32> to vector<64x128xf32>
    %11 = vector.broadcast %9 : vector<1x128xf32> to vector<64x128xf32>
    %12 = arith.mulf %10, %11 : vector<64x128xf32>
    %13 = arith.addf %7, %12 : vector<64x128xf32>
    %14 = vector.broadcast %2 : vector<1x128xf32> to vector<64x128xf32>
    %15 = arith.addf %13, %14 : vector<64x128xf32>
    %cst = arith.constant 0.000000e+00 : f32
    %16 = vector.broadcast %cst : f32 to vector<64x128xf32>
    %17 = arith.cmpf ogt, %15, %16 : vector<64x128xf32>
    %cst_5 = arith.constant 0.00999999977 : f32
    %18 = vector.broadcast %cst_5 : f32 to vector<64x128xf32>
    %19 = arith.mulf %18, %15 : vector<64x128xf32>
    %20 = arith.select %17, %15, %19 : vector<64x128xi1>, vector<64x128xf32>
    %c0_6 = arith.constant 0 : index
    %c0_7 = arith.constant 0 : index
    %21 = vector.load %arg4[%c0_6, %c0_7] : memref<128x128xf32, #tpu.memory_space<vmem>>, vector<128x128xf32>
    %c0_8 = arith.constant 0 : index
    %c0_9 = arith.constant 0 : index
    %22 = vector.load %arg5[%c0_8, %c0_9] : memref<1x128xf32, #tpu.memory_space<vmem>>, vector<1x128xf32>
    %cst_10 = arith.constant dense<0.000000e+00> : vector<64x128xf32>
    %23 = tpu.matmul %20, %21, %cst_10 {dimension_numbers = #tpu.dot_dimension_numbers<[1], [0], [0], [1], [0, 0, 1, 1], [], []>} : vector<64x128xf32>, vector<128x128xf32>, vector<64x128xf32> -> vector<64x128xf32>
    %24 = vector.broadcast %22 : vector<1x128xf32> to vector<64x128xf32>
    %25 = arith.addf %23, %24 : vector<64x128xf32>
    %cst_11 = arith.constant 0.000000e+00 : f32
    %26 = vector.broadcast %cst_11 : f32 to vector<64x128xf32>
    %27 = arith.cmpf ogt, %25, %26 : vector<64x128xf32>
    %cst_12 = arith.constant 0.00999999977 : f32
    %28 = vector.broadcast %cst_12 : f32 to vector<64x128xf32>
    %29 = arith.mulf %28, %25 : vector<64x128xf32>
    %30 = arith.select %27, %25, %29 : vector<64x128xi1>, vector<64x128xf32>
    %c0_13 = arith.constant 0 : index
    %c0_14 = arith.constant 0 : index
    %31 = vector.load %arg6[%c0_13, %c0_14] : memref<128x128xf32, #tpu.memory_space<vmem>>, vector<128x128xf32>
    %c0_15 = arith.constant 0 : index
    %c0_16 = arith.constant 0 : index
    %32 = vector.load %arg7[%c0_15, %c0_16] : memref<1x128xf32, #tpu.memory_space<vmem>>, vector<1x128xf32>
    %cst_17 = arith.constant dense<0.000000e+00> : vector<64x128xf32>
    %33 = tpu.matmul %30, %31, %cst_17 {dimension_numbers = #tpu.dot_dimension_numbers<[1], [0], [0], [1], [0, 0, 1, 1], [], []>} : vector<64x128xf32>, vector<128x128xf32>, vector<64x128xf32> -> vector<64x128xf32>
    %34 = vector.broadcast %32 : vector<1x128xf32> to vector<64x128xf32>
    %35 = arith.addf %33, %34 : vector<64x128xf32>
    %cst_18 = arith.constant 0.000000e+00 : f32
    %36 = vector.broadcast %cst_18 : f32 to vector<64x128xf32>
    %37 = arith.cmpf ogt, %35, %36 : vector<64x128xf32>
    %cst_19 = arith.constant 0.00999999977 : f32
    %38 = vector.broadcast %cst_19 : f32 to vector<64x128xf32>
    %39 = arith.mulf %38, %35 : vector<64x128xf32>
    %40 = arith.select %37, %35, %39 : vector<64x128xi1>, vector<64x128xf32>
    %c0_20 = arith.constant 0 : index
    %c0_21 = arith.constant 0 : index
    %41 = vector.load %arg8[%c0_20, %c0_21] : memref<128x128xf32, #tpu.memory_space<vmem>>, vector<128x128xf32>
    %c0_22 = arith.constant 0 : index
    %c0_23 = arith.constant 0 : index
    %42 = vector.load %arg9[%c0_22, %c0_23] : memref<1x128xf32, #tpu.memory_space<vmem>>, vector<1x128xf32>
    %cst_24 = arith.constant dense<0.000000e+00> : vector<64x128xf32>
    %43 = tpu.matmul %40, %41, %cst_24 {dimension_numbers = #tpu.dot_dimension_numbers<[1], [0], [0], [1], [0, 0, 1, 1], [], []>} : vector<64x128xf32>, vector<128x128xf32>, vector<64x128xf32> -> vector<64x128xf32>
    %44 = vector.broadcast %42 : vector<1x128xf32> to vector<64x128xf32>
    %45 = arith.addf %43, %44 : vector<64x128xf32>
    %cst_25 = arith.constant 0.000000e+00 : f32
    %46 = vector.broadcast %cst_25 : f32 to vector<64x128xf32>
    %47 = arith.cmpf ogt, %45, %46 : vector<64x128xf32>
    %cst_26 = arith.constant 0.00999999977 : f32
    %48 = vector.broadcast %cst_26 : f32 to vector<64x128xf32>
    %49 = arith.mulf %48, %45 : vector<64x128xf32>
    %50 = arith.select %47, %45, %49 : vector<64x128xi1>, vector<64x128xf32>
    %c0_27 = arith.constant 0 : index
    %c0_28 = arith.constant 0 : index
    %51 = vector.load %arg10[%c0_27, %c0_28] : memref<128x128xf32, #tpu.memory_space<vmem>>, vector<128x128xf32>
    %c0_29 = arith.constant 0 : index
    %c0_30 = arith.constant 0 : index
    %52 = vector.load %arg11[%c0_29, %c0_30] : memref<1x128xf32, #tpu.memory_space<vmem>>, vector<1x128xf32>
    %cst_31 = arith.constant dense<0.000000e+00> : vector<64x128xf32>
    %53 = tpu.matmul %50, %51, %cst_31 {dimension_numbers = #tpu.dot_dimension_numbers<[1], [0], [0], [1], [0, 0, 1, 1], [], []>} : vector<64x128xf32>, vector<128x128xf32>, vector<64x128xf32> -> vector<64x128xf32>
    %54 = vector.broadcast %52 : vector<1x128xf32> to vector<64x128xf32>
    %55 = arith.addf %53, %54 : vector<64x128xf32>
    %cst_32 = arith.constant 0.000000e+00 : f32
    %56 = vector.broadcast %cst_32 : f32 to vector<64x128xf32>
    %57 = arith.cmpf ogt, %55, %56 : vector<64x128xf32>
    %cst_33 = arith.constant 0.00999999977 : f32
    %58 = vector.broadcast %cst_33 : f32 to vector<64x128xf32>
    %59 = arith.mulf %58, %55 : vector<64x128xf32>
    %60 = arith.select %57, %55, %59 : vector<64x128xi1>, vector<64x128xf32>
    %c0_34 = arith.constant 0 : index
    %c0_35 = arith.constant 0 : index
    %61 = vector.load %arg12[%c0_34, %c0_35] : memref<128x128xf32, #tpu.memory_space<vmem>>, vector<128x128xf32>
    %c0_36 = arith.constant 0 : index
    %c0_37 = arith.constant 0 : index
    %62 = vector.load %arg13[%c0_36, %c0_37] : memref<1x128xf32, #tpu.memory_space<vmem>>, vector<1x128xf32>
    %cst_38 = arith.constant dense<0.000000e+00> : vector<64x128xf32>
    %63 = tpu.matmul %60, %61, %cst_38 {dimension_numbers = #tpu.dot_dimension_numbers<[1], [0], [0], [1], [0, 0, 1, 1], [], []>} : vector<64x128xf32>, vector<128x128xf32>, vector<64x128xf32> -> vector<64x128xf32>
    %64 = vector.broadcast %62 : vector<1x128xf32> to vector<64x128xf32>
    %65 = arith.addf %63, %64 : vector<64x128xf32>
    %66 = vector.extract_strided_slice %65 {offsets = [0, 0], sizes = [64, 2], strides = [1, 1]} : vector<64x128xf32> to vector<64x2xf32>
    %c0_39 = arith.constant 0 : index
    %c0_40 = arith.constant 0 : index
    %67 = vector.load %arg14[%c0_39, %c0_40] : memref<64x2xf32, #tpu.memory_space<vmem>>, vector<64x2xf32>
    tpu.vector_store %arg14[%c0_39, %c0_40], %66 {strides = array<i32>} : memref<64x2xf32, #tpu.memory_space<vmem>>, vector<64x2xf32>,
    return
  }
  func.func @transform_0(%arg0: i32) -> (i32, i32) {
    %c0_i32 = arith.constant 0 : i32
    %c0_i32_0 = arith.constant 0 : i32
    return %arg0, %c0_i32 : i32, i32
  }
  func.func @transform_1(%arg0: i32) -> (i32, i32) {
    %c0_i32 = arith.constant 0 : i32
    %c0_i32_0 = arith.constant 0 : i32
    %c0_i32_1 = arith.constant 0 : i32
    return %c0_i32, %c0_i32_0 : i32, i32
  }
  func.func @transform_2(%arg0: i32) -> (i32, i32) {
    %c0_i32 = arith.constant 0 : i32
    %c0_i32_0 = arith.constant 0 : i32
    %c0_i32_1 = arith.constant 0 : i32
    return %c0_i32, %c0_i32_0 : i32, i32
  }
  func.func @transform_3(%arg0: i32) -> (i32, i32) {
    %c0_i32 = arith.constant 0 : i32
    %c0_i32_0 = arith.constant 0 : i32
    %c0_i32_1 = arith.constant 0 : i32
    return %c0_i32, %c0_i32_0 : i32, i32
  }
  func.func @transform_4(%arg0: i32) -> (i32, i32) {
    %c0_i32 = arith.constant 0 : i32
    %c0_i32_0 = arith.constant 0 : i32
    %c0_i32_1 = arith.constant 0 : i32
    return %c0_i32, %c0_i32_0 : i32, i32
  }
  func.func @transform_5(%arg0: i32) -> (i32, i32) {
    %c0_i32 = arith.constant 0 : i32
    %c0_i32_0 = arith.constant 0 : i32
    %c0_i32_1 = arith.constant 0 : i32
    return %c0_i32, %c0_i32_0 : i32, i32
  }
  func.func @transform_6(%arg0: i32) -> (i32, i32) {
    %c0_i32 = arith.constant 0 : i32
    %c0_i32_0 = arith.constant 0 : i32
    %c0_i32_1 = arith.constant 0 : i32
    return %c0_i32, %c0_i32_0 : i32, i32
  }
  func.func @transform_7(%arg0: i32) -> (i32, i32) {
    %c0_i32 = arith.constant 0 : i32
    %c0_i32_0 = arith.constant 0 : i32
    %c0_i32_1 = arith.constant 0 : i32
    return %c0_i32, %c0_i32_0 : i32, i32
  }
  func.func @transform_8(%arg0: i32) -> (i32, i32) {
    %c0_i32 = arith.constant 0 : i32
    %c0_i32_0 = arith.constant 0 : i32
    %c0_i32_1 = arith.constant 0 : i32
    return %c0_i32, %c0_i32_0 : i32, i32
  }
  func.func @transform_9(%arg0: i32) -> (i32, i32) {
    %c0_i32 = arith.constant 0 : i32
    %c0_i32_0 = arith.constant 0 : i32
    %c0_i32_1 = arith.constant 0 : i32
    return %c0_i32, %c0_i32_0 : i32, i32
  }
  func.func @transform_10(%arg0: i32) -> (i32, i32) {
    %c0_i32 = arith.constant 0 : i32
    %c0_i32_0 = arith.constant 0 : i32
    %c0_i32_1 = arith.constant 0 : i32
    return %c0_i32, %c0_i32_0 : i32, i32
  }
  func.func @transform_11(%arg0: i32) -> (i32, i32) {
    %c0_i32 = arith.constant 0 : i32
    %c0_i32_0 = arith.constant 0 : i32
    %c0_i32_1 = arith.constant 0 : i32
    return %c0_i32, %c0_i32_0 : i32, i32
  }
  func.func @transform_12(%arg0: i32) -> (i32, i32) {
    %c0_i32 = arith.constant 0 : i32
    %c0_i32_0 = arith.constant 0 : i32
    %c0_i32_1 = arith.constant 0 : i32
    return %c0_i32, %c0_i32_0 : i32, i32
  }
  func.func @transform_13(%arg0: i32) -> (i32, i32) {
    %c0_i32 = arith.constant 0 : i32
    %c0_i32_0 = arith.constant 0 : i32
    return %arg0, %c0_i32 : i32, i32
  }
}

</mosaic_0001>

<llo_original>
// kernel: mlp_forward.1
$region0: #{mlp_forward.1}
  #allocation0 [shape = 'u32[]', space=smem, size = 0x4, offset = 0x4, fixed_abs, tag = 'smem constant byte address 0x4 - core index']
  #allocation1 [shape = 'u32[144,128]{1,0:T(1,128)}', space=vmem, size = 0x12000, scoped, tag = 'internal scratch']
  %s0 = inlined_call_operand.vmem [shape: f32[64,2], index: 0, kind: input, shape index: {}]
  %s1 = inlined_call_operand.vmem [shape: f32[2,128], index: 1, kind: input, shape index: {}]
  %s2 = inlined_call_operand.vmem [shape: f32[1,128], index: 2, kind: input, shape index: {}]
  %s3 = inlined_call_operand.vmem [shape: f32[128,128], index: 3, kind: input, shape index: {}]
  %s4 = inlined_call_operand.vmem [shape: f32[1,128], index: 4, kind: input, shape index: {}]
  %s5 = inlined_call_operand.vmem [shape: f32[128,128], index: 5, kind: input, shape index: {}]
  %s6 = inlined_call_operand.vmem [shape: f32[1,128], index: 6, kind: input, shape index: {}]
  %s7 = inlined_call_operand.vmem [shape: f32[128,128], index: 7, kind: input, shape index: {}]
  %s8 = inlined_call_operand.vmem [shape: f32[1,128], index: 8, kind: input, shape index: {}]
  %s9 = inlined_call_operand.vmem [shape: f32[128,128], index: 9, kind: input, shape index: {}]
  %s10 = inlined_call_operand.vmem [shape: f32[1,128], index: 10, kind: input, shape index: {}]
  %s11 = inlined_call_operand.vmem [shape: f32[128,128], index: 11, kind: input, shape index: {}]
  %s12 = inlined_call_operand.vmem [shape: f32[1,128], index: 12, kind: input, shape index: {}]
  %s13 = inlined_call_operand.vmem [shape: f32[64,2], index: 13, kind: output, shape index: {}]
  %s14 = sld [smem:[#allocation0]]
  $region62: #{mlp_forward.1} parent=0
    _
  %s16 = ssub.s32 1, %s14
  %s17 = scalar_select 0, %s16, %s14
  // Predicated region
  $region2: #{mlp_forward.1} parent=0 // pred_check
    _
  $region3: #{mlp_forward.1} parent=0 // pred_check_branch
    %19 = sbr.rel (0) target = $region5
  $region4: #{mlp_forward.1} parent=0 // pred_region
    _
  $region5: #{mlp_forward.1} parent=0 // pred_fallthru
    _
  // Predicated region
  $region6: #{mlp_forward.1} parent=0 // pred_check
    _
  $region7: #{mlp_forward.1} parent=0 // pred_check_branch
    %21 = sbr.rel (0) target = $region9
  $region8: #{mlp_forward.1} parent=0 // pred_region
    _
  $region9: #{mlp_forward.1} parent=0 // pred_fallthru
    _
  // Predicated region
  $region10: #{mlp_forward.1} parent=0 // pred_check
    _
  $region11: #{mlp_forward.1} parent=0 // pred_check_branch
    %23 = sbr.rel (0) target = $region13
  $region12: #{mlp_forward.1} parent=0 // pred_region
    _
  $region13: #{mlp_forward.1} parent=0 // pred_fallthru
    _
  // Predicated region
  $region14: #{mlp_forward.1} parent=0 // pred_check
    _
  $region15: #{mlp_forward.1} parent=0 // pred_check_branch
    %25 = sbr.rel (0) target = $region17
  $region16: #{mlp_forward.1} parent=0 // pred_region
    _
  $region17: #{mlp_forward.1} parent=0 // pred_fallthru
    _
  // Predicated region
  $region18: #{mlp_forward.1} parent=0 // pred_check
    _
  $region19: #{mlp_forward.1} parent=0 // pred_check_branch
    %27 = sbr.rel (0) target = $region21
  $region20: #{mlp_forward.1} parent=0 // pred_region
    _
  $region21: #{mlp_forward.1} parent=0 // pred_fallthru
    _
  // Predicated region
  $region22: #{mlp_forward.1} parent=0 // pred_check
    _
  $region23: #{mlp_forward.1} parent=0 // pred_check_branch
    %29 = sbr.rel (0) target = $region25
  $region24: #{mlp_forward.1} parent=0 // pred_region
    _
  $region25: #{mlp_forward.1} parent=0 // pred_fallthru
    _
  // Predicated region
  $region26: #{mlp_forward.1} parent=0 // pred_check
    _
  $region27: #{mlp_forward.1} parent=0 // pred_check_branch
    %31 = sbr.rel (0) target = $region29
  $region28: #{mlp_forward.1} parent=0 // pred_region
    _
  $region29: #{mlp_forward.1} parent=0 // pred_fallthru
    _
  // Predicated region
  $region30: #{mlp_forward.1} parent=0 // pred_check
    _
  $region31: #{mlp_forward.1} parent=0 // pred_check_branch
    %33 = sbr.rel (0) target = $region33
  $region32: #{mlp_forward.1} parent=0 // pred_region
    _
  $region33: #{mlp_forward.1} parent=0 // pred_fallthru
    _
  // Predicated region
  $region34: #{mlp_forward.1} parent=0 // pred_check
    _
  $region35: #{mlp_forward.1} parent=0 // pred_check_branch
    %35 = sbr.rel (0) target = $region37
  $region36: #{mlp_forward.1} parent=0 // pred_region
    _
  $region37: #{mlp_forward.1} parent=0 // pred_fallthru
    _
  // Predicated region
  $region38: #{mlp_forward.1} parent=0 // pred_check
    _
  $region39: #{mlp_forward.1} parent=0 // pred_check_branch
    %37 = sbr.rel (0) target = $region41
  $region40: #{mlp_forward.1} parent=0 // pred_region
    _
  $region41: #{mlp_forward.1} parent=0 // pred_fallthru
    _
  // Predicated region
  $region42: #{mlp_forward.1} parent=0 // pred_check
    _
  $region43: #{mlp_forward.1} parent=0 // pred_check_branch
    %39 = sbr.rel (0) target = $region45
  $region44: #{mlp_forward.1} parent=0 // pred_region
    _
  $region45: #{mlp_forward.1} parent=0 // pred_fallthru
    _
  // Predicated region
  $region46: #{mlp_forward.1} parent=0 // pred_check
    _
  $region47: #{mlp_forward.1} parent=0 // pred_check_branch
    %41 = sbr.rel (0) target = $region49
  $region48: #{mlp_forward.1} parent=0 // pred_region
    _
  $region49: #{mlp_forward.1} parent=0 // pred_fallthru
    _
  // Predicated region
  $region50: #{mlp_forward.1} parent=0 // pred_check
    _
  $region51: #{mlp_forward.1} parent=0 // pred_check_branch
    %43 = sbr.rel (0) target = $region53
  $region52: #{mlp_forward.1} parent=0 // pred_region
    _
  $region53: #{mlp_forward.1} parent=0 // pred_fallthru
    _
  %v44 = vld [vmem:[%s0] sm:$0xff]
  %v45 = vld [vmem:[%s0 + $0x8] sm:$0xff]
  %v46 = vld [vmem:[%s0 + $0x10] sm:$0xff]
  %v47 = vld [vmem:[%s0 + $0x18] sm:$0xff]
  %v48 = vld [vmem:[%s0 + $0x20] sm:$0xff]
  %v49 = vld [vmem:[%s0 + $0x28] sm:$0xff]
  %v50 = vld [vmem:[%s0 + $0x30] sm:$0xff]
  %v51 = vld [vmem:[%s0 + $0x38] sm:$0xff]
  %v52 = vld [vmem:[%s1] sm:$0x3]
  %v53 = vld [vmem:[%s2] sm:$0x1]
  %55 = vset.pattern.permute.xlu0 0
  %56 = vperm.xlu0 %55, %v44
  %v57 = vpop.permute.xlu0 %56
  %60 = vset.pattern.permute.xlu0 0
  %61 = vperm.xlu0 %60, %v45
  %v62 = vpop.permute.xlu0 %61
  %65 = vset.pattern.permute.xlu0 0
  %66 = vperm.xlu0 %65, %v46
  %v67 = vpop.permute.xlu0 %66
  %70 = vset.pattern.permute.xlu0 0
  %71 = vperm.xlu0 %70, %v47
  %v72 = vpop.permute.xlu0 %71
  %75 = vset.pattern.permute.xlu0 0
  %76 = vperm.xlu0 %75, %v48
  %v77 = vpop.permute.xlu0 %76
  %80 = vset.pattern.permute.xlu0 0
  %81 = vperm.xlu0 %80, %v49
  %v82 = vpop.permute.xlu0 %81
  %85 = vset.pattern.permute.xlu0 0
  %86 = vperm.xlu0 %85, %v50
  %v87 = vpop.permute.xlu0 %86
  %90 = vset.pattern.permute.xlu0 0
  %91 = vperm.xlu0 %90, %v51
  %v92 = vpop.permute.xlu0 %91
  %v94 = vlaneseq
  %v95 = vshrl.u32 %v94, 7
  %v96 = vsub.s32 0, %v95
  %v97 = vrot.slane %v52, %v96
  %v98 = vmul.f32 %v57, %v97
  %v99 = vmul.f32 %v62, %v97
  %v100 = vmul.f32 %v67, %v97
  %v101 = vmul.f32 %v72, %v97
  %v102 = vmul.f32 %v77, %v97
  %v103 = vmul.f32 %v82, %v97
  %v104 = vmul.f32 %v87, %v97
  %v105 = vmul.f32 %v92, %v97
  %106 = vset.pattern.permute.xlu0 1
  %107 = vperm.xlu0 %106, %v44
  %v108 = vpop.permute.xlu0 %107
  %110 = vset.pattern.permute.xlu0 1
  %111 = vperm.xlu0 %110, %v45
  %v112 = vpop.permute.xlu0 %111
  %114 = vset.pattern.permute.xlu0 1
  %115 = vperm.xlu0 %114, %v46
  %v116 = vpop.permute.xlu0 %115
  %118 = vset.pattern.permute.xlu0 1
  %119 = vperm.xlu0 %118, %v47
  %v120 = vpop.permute.xlu0 %119
  %122 = vset.pattern.permute.xlu0 1
  %123 = vperm.xlu0 %122, %v48
  %v124 = vpop.permute.xlu0 %123
  %126 = vset.pattern.permute.xlu0 1
  %127 = vperm.xlu0 %126, %v49
  %v128 = vpop.permute.xlu0 %127
  %130 = vset.pattern.permute.xlu0 1
  %131 = vperm.xlu0 %130, %v50
  %v132 = vpop.permute.xlu0 %131
  %134 = vset.pattern.permute.xlu0 1
  %135 = vperm.xlu0 %134, %v51
  %v136 = vpop.permute.xlu0 %135
  %v138 = vlaneseq
  %v139 = vshrl.u32 %v138, 7
  %v140 = vsub.s32 1, %v139
  %v141 = vrot.slane %v52, %v140
  %v142 = vmul.f32 %v108, %v141
  %v143 = vmul.f32 %v112, %v141
  %v144 = vmul.f32 %v116, %v141
  %v145 = vmul.f32 %v120, %v141
  %v146 = vmul.f32 %v124, %v141
  %v147 = vmul.f32 %v128, %v141
  %v148 = vmul.f32 %v132, %v141
  %v149 = vmul.f32 %v136, %v141
  %v150 = vadd.f32 %v98, %v142
  %v151 = vadd.f32 %v99, %v143
  %v152 = vadd.f32 %v100, %v144
  %v153 = vadd.f32 %v101, %v145
  %v154 = vadd.f32 %v102, %v146
  %v155 = vadd.f32 %v103, %v147
  %v156 = vadd.f32 %v104, %v148
  %v157 = vadd.f32 %v105, %v149
  %v159 = vlaneseq
  %v160 = vshrl.u32 %v159, 7
  %v161 = vsub.s32 0, %v160
  %v162 = vrot.slane %v53, %v161
  %v164 = vadd.f32 %v150, %v162
  %v165 = vadd.f32 %v151, %v162
  %v166 = vadd.f32 %v152, %v162
  %v167 = vadd.f32 %v153, %v162
  %v168 = vadd.f32 %v154, %v162
  %v169 = vadd.f32 %v155, %v162
  %v170 = vadd.f32 %v156, %v162
  %v171 = vadd.f32 %v157, %v162
  %vm172 = vcmp.gt.f32.partialorder %v164, 0.0
  %vm173 = vcmp.gt.f32.partialorder %v165, 0.0
  %vm174 = vcmp.gt.f32.partialorder %v166, 0.0
  %vm175 = vcmp.gt.f32.partialorder %v167, 0.0
  %vm176 = vcmp.gt.f32.partialorder %v168, 0.0
  %vm177 = vcmp.gt.f32.partialorder %v169, 0.0
  %vm178 = vcmp.gt.f32.partialorder %v170, 0.0
  %vm179 = vcmp.gt.f32.partialorder %v171, 0.0
  %v180 = vmul.f32 %v164, 0.01
  %v181 = vmul.f32 %v165, 0.01
  %v182 = vmul.f32 %v166, 0.01
  %v183 = vmul.f32 %v167, 0.01
  %v184 = vmul.f32 %v168, 0.01
  %v185 = vmul.f32 %v169, 0.01
  %v186 = vmul.f32 %v170, 0.01
  %v187 = vmul.f32 %v171, 0.01
  %v188 = vsel %vm172, %v164, %v180
  %v189 = vsel %vm173, %v165, %v181
  %v190 = vsel %vm174, %v166, %v182
  %v191 = vsel %vm175, %v167, %v183
  %v192 = vsel %vm176, %v168, %v184
  %v193 = vsel %vm177, %v169, %v185
  %v194 = vsel %vm178, %v170, %v186
  %v195 = vsel %vm179, %v171, %v187
  %v196 = vld [vmem:[%s3] sm:$0xff]
  %v197 = vld [vmem:[%s3 + $0x8] sm:$0xff]
  %v198 = vld [vmem:[%s3 + $0x10] sm:$0xff]
  %v199 = vld [vmem:[%s3 + $0x18] sm:$0xff]
  %v200 = vld [vmem:[%s3 + $0x20] sm:$0xff]
  %v201 = vld [vmem:[%s3 + $0x28] sm:$0xff]
  %v202 = vld [vmem:[%s3 + $0x30] sm:$0xff]
  %v203 = vld [vmem:[%s3 + $0x38] sm:$0xff]
  %v204 = vld [vmem:[%s3 + $0x40] sm:$0xff]
  %v205 = vld [vmem:[%s3 + $0x48] sm:$0xff]
  %v206 = vld [vmem:[%s3 + $0x50] sm:$0xff]
  %v207 = vld [vmem:[%s3 + $0x58] sm:$0xff]
  %v208 = vld [vmem:[%s3 + $0x60] sm:$0xff]
  %v209 = vld [vmem:[%s3 + $0x68] sm:$0xff]
  %v210 = vld [vmem:[%s3 + $0x70] sm:$0xff]
  %v211 = vld [vmem:[%s3 + $0x78] sm:$0xff]
  %v212 = vld [vmem:[%s4] sm:$0x1]
  %v214 = vlaneseq
  %v215 = vshrl.u32 %v214, 7
  %v216 = vsub.s32 0, %v215
  %v217 = vrot.slane %v212, %v216
  %219 = vmatprep.subr.mxu0 0.0
  %220 = vmatpush1.msra.mxu0 %v196
  %221 = vmatprep.subr.mxu0 0.0
  %222 = vmatpush1.msra.mxu0 %v197
  %223 = vmatprep.subr.mxu0 0.0
  %224 = vmatpush1.msra.mxu0 %v198
  %225 = vmatprep.subr.mxu0 0.0
  %226 = vmatpush1.msra.mxu0 %v199
  %227 = vmatprep.subr.mxu0 0.0
  %228 = vmatpush1.msra.mxu0 %v200
  %229 = vmatprep.subr.mxu0 0.0
  %230 = vmatpush1.msra.mxu0 %v201
  %231 = vmatprep.subr.mxu0 0.0
  %232 = vmatpush1.msra.mxu0 %v202
  %233 = vmatprep.subr.mxu0 0.0
  %234 = vmatpush1.msra.mxu0 %v203
  %235 = vmatprep.subr.mxu0 0.0
  %236 = vmatpush1.msra.mxu0 %v204
  %237 = vmatprep.subr.mxu0 0.0
  %238 = vmatpush1.msra.mxu0 %v205
  %239 = vmatprep.subr.mxu0 0.0
  %240 = vmatpush1.msra.mxu0 %v206
  %241 = vmatprep.subr.mxu0 0.0
  %242 = vmatpush1.msra.mxu0 %v207
  %243 = vmatprep.subr.mxu0 0.0
  %244 = vmatpush1.msra.mxu0 %v208
  %245 = vmatprep.subr.mxu0 0.0
  %246 = vmatpush1.msra.mxu0 %v209
  %247 = vmatprep.subr.mxu0 0.0
  %248 = vmatpush1.msra.mxu0 %v210
  %249 = vmatprep.subr.mxu0 0.0
  %250 = vmatpush1.msra.mxu0 %v211
  %251 = vmatprep.subr.mxu0 0.0
  %252 = vmatpush1.msra.mxu0 0.0
  %253 = vmatprep.subr.mxu0 0.0
  %254 = vmatpush1.msra.mxu0 0.0
  %255 = vmatprep.subr.mxu0 0.0
  %256 = vmatpush1.msra.mxu0 0.0
  %257 = vmatprep.subr.mxu0 0.0
  %258 = vmatpush1.msra.mxu0 0.0
  %259 = vmatprep.subr.mxu0 0.0
  %260 = vmatpush1.msra.mxu0 0.0
  %261 = vmatprep.subr.mxu0 0.0
  %262 = vmatpush1.msra.mxu0 0.0
  %263 = vmatprep.subr.mxu0 0.0
  %264 = vmatpush1.msra.mxu0 0.0
  %265 = vmatprep.subr.mxu0 0.0
  %266 = vmatpush1.msra.mxu0 0.0
  %267 = vmatprep.subr.mxu0 0.0
  %268 = vmatpush1.msra.mxu0 0.0
  %269 = vmatprep.subr.mxu0 0.0
  %270 = vmatpush1.msra.mxu0 0.0
  %271 = vmatprep.subr.mxu0 0.0
  %272 = vmatpush1.msra.mxu0 0.0
  %273 = vmatprep.subr.mxu0 0.0
  %274 = vmatpush1.msra.mxu0 0.0
  %275 = vmatprep.subr.mxu0 0.0
  %276 = vmatpush1.msra.mxu0 0.0
  %277 = vmatprep.subr.mxu0 0.0
  %278 = vmatpush1.msra.mxu0 0.0
  %279 = vmatprep.subr.mxu0 0.0
  %280 = vmatpush1.msra.mxu0 0.0
  %281 = vmatprep.subr.mxu0 0.0
  %282 = vmatpush1.msra.mxu0 0.0
  %283 = vmatprep.mubr.f32.mxu0 0.0
  %284 = vmatmul.mubr.f32.gmra.mrb[0].mxu0 %v188
  %v285 = vpop.f32.mrb[0].mxu0
  %v286 = vadd.f32 %v217, %v285
  %v287 = vpop.f32.mrb[0].mxu0
  %288 = vmatprep.mubr.f32.mxu0 0.0
  %289 = vmatmul.mubr.f32.gmra.mrb[0].mxu0 %v189
  %v290 = vpop.f32.mrb[0].mxu0
  %v291 = vadd.f32 %v217, %v290
  %v292 = vpop.f32.mrb[0].mxu0
  %293 = vmatprep.mubr.f32.mxu0 0.0
  %294 = vmatmul.mubr.f32.gmra.mrb[0].mxu0 %v190
  %v295 = vpop.f32.mrb[0].mxu0
  %v296 = vadd.f32 %v217, %v295
  %v297 = vpop.f32.mrb[0].mxu0
  %298 = vmatprep.mubr.f32.mxu0 0.0
  %299 = vmatmul.mubr.f32.gmra.mrb[0].mxu0 %v191
  %v300 = vpop.f32.mrb[0].mxu0
  %v301 = vadd.f32 %v217, %v300
  %v302 = vpop.f32.mrb[0].mxu0
  %303 = vmatprep.mubr.f32.mxu0 0.0
  %304 = vmatmul.mubr.f32.gmra.mrb[0].mxu0 %v192
  %v305 = vpop.f32.mrb[0].mxu0
  %v306 = vadd.f32 %v217, %v305
  %v307 = vpop.f32.mrb[0].mxu0
  %308 = vmatprep.mubr.f32.mxu0 0.0
  %309 = vmatmul.mubr.f32.gmra.mrb[0].mxu0 %v193
  %v310 = vpop.f32.mrb[0].mxu0
  %v311 = vadd.f32 %v217, %v310
  %v312 = vpop.f32.mrb[0].mxu0
  %313 = vmatprep.mubr.f32.mxu0 0.0
  %314 = vmatmul.mubr.f32.gmra.mrb[0].mxu0 %v194
  %v315 = vpop.f32.mrb[0].mxu0
  %v316 = vadd.f32 %v217, %v315
  %v317 = vpop.f32.mrb[0].mxu0
  %318 = vmatprep.mubr.f32.mxu0 0.0
  %319 = vmatmul.mubr.f32.gmra.mrb[0].mxu0 %v195
  %v320 = vpop.f32.mrb[0].mxu0
  %v321 = vadd.f32 %v217, %v320
  %v322 = vpop.f32.mrb[0].mxu0
  %323 = vdwg.mxu0
  %vm324 = vcmp.gt.f32.partialorder %v286, 0.0
  %vm325 = vcmp.gt.f32.partialorder %v291, 0.0
  %vm326 = vcmp.gt.f32.partialorder %v296, 0.0
  %vm327 = vcmp.gt.f32.partialorder %v301, 0.0
  %vm328 = vcmp.gt.f32.partialorder %v306, 0.0
  %vm329 = vcmp.gt.f32.partialorder %v311, 0.0
  %vm330 = vcmp.gt.f32.partialorder %v316, 0.0
  %vm331 = vcmp.gt.f32.partialorder %v321, 0.0
  %v332 = vmul.f32 %v286, 0.01
  %v333 = vmul.f32 %v291, 0.01
  %v334 = vmul.f32 %v296, 0.01
  %v335 = vmul.f32 %v301, 0.01
  %v336 = vmul.f32 %v306, 0.01
  %v337 = vmul.f32 %v311, 0.01
  %v338 = vmul.f32 %v316, 0.01
  %v339 = vmul.f32 %v321, 0.01
  %v340 = vsel %vm324, %v286, %v332
  %v341 = vsel %vm325, %v291, %v333
  %v342 = vsel %vm326, %v296, %v334
  %v343 = vsel %vm327, %v301, %v335
  %v344 = vsel %vm328, %v306, %v336
  %v345 = vsel %vm329, %v311, %v337
  %v346 = vsel %vm330, %v316, %v338
  %v347 = vsel %vm331, %v321, %v339
  %v348 = vld [vmem:[%s5] sm:$0xff]
  %v349 = vld [vmem:[%s5 + $0x8] sm:$0xff]
  %v350 = vld [vmem:[%s5 + $0x10] sm:$0xff]
  %v351 = vld [vmem:[%s5 + $0x18] sm:$0xff]
  %v352 = vld [vmem:[%s5 + $0x20] sm:$0xff]
  %v353 = vld [vmem:[%s5 + $0x28] sm:$0xff]
  %v354 = vld [vmem:[%s5 + $0x30] sm:$0xff]
  %v355 = vld [vmem:[%s5 + $0x38] sm:$0xff]
  %v356 = vld [vmem:[%s5 + $0x40] sm:$0xff]
  %v357 = vld [vmem:[%s5 + $0x48] sm:$0xff]
  %v358 = vld [vmem:[%s5 + $0x50] sm:$0xff]
  %v359 = vld [vmem:[%s5 + $0x58] sm:$0xff]
  %v360 = vld [vmem:[%s5 + $0x60] sm:$0xff]
  %v361 = vld [vmem:[%s5 + $0x68] sm:$0xff]
  %v362 = vld [vmem:[%s5 + $0x70] sm:$0xff]
  %v363 = vld [vmem:[%s5 + $0x78] sm:$0xff]
  %v364 = vld [vmem:[%s6] sm:$0x1]
  %v366 = vlaneseq
  %v367 = vshrl.u32 %v366, 7
  %v368 = vsub.s32 0, %v367
  %v369 = vrot.slane %v364, %v368
  %371 = vmatprep.subr.mxu0 0.0
  %372 = vmatpush1.msra.mxu0 %v348
  %373 = vmatprep.subr.mxu0 0.0
  %374 = vmatpush1.msra.mxu0 %v349
  %375 = vmatprep.subr.mxu0 0.0
  %376 = vmatpush1.msra.mxu0 %v350
  %377 = vmatprep.subr.mxu0 0.0
  %378 = vmatpush1.msra.mxu0 %v351
  %379 = vmatprep.subr.mxu0 0.0
  %380 = vmatpush1.msra.mxu0 %v352
  %381 = vmatprep.subr.mxu0 0.0
  %382 = vmatpush1.msra.mxu0 %v353
  %383 = vmatprep.subr.mxu0 0.0
  %384 = vmatpush1.msra.mxu0 %v354
  %385 = vmatprep.subr.mxu0 0.0
  %386 = vmatpush1.msra.mxu0 %v355
  %387 = vmatprep.subr.mxu0 0.0
  %388 = vmatpush1.msra.mxu0 %v356
  %389 = vmatprep.subr.mxu0 0.0
  %390 = vmatpush1.msra.mxu0 %v357
  %391 = vmatprep.subr.mxu0 0.0
  %392 = vmatpush1.msra.mxu0 %v358
  %393 = vmatprep.subr.mxu0 0.0
  %394 = vmatpush1.msra.mxu0 %v359
  %395 = vmatprep.subr.mxu0 0.0
  %396 = vmatpush1.msra.mxu0 %v360
  %397 = vmatprep.subr.mxu0 0.0
  %398 = vmatpush1.msra.mxu0 %v361
  %399 = vmatprep.subr.mxu0 0.0
  %400 = vmatpush1.msra.mxu0 %v362
  %401 = vmatprep.subr.mxu0 0.0
  %402 = vmatpush1.msra.mxu0 %v363
  %403 = vmatprep.subr.mxu0 0.0
  %404 = vmatpush1.msra.mxu0 0.0
  %405 = vmatprep.subr.mxu0 0.0
  %406 = vmatpush1.msra.mxu0 0.0
  %407 = vmatprep.subr.mxu0 0.0
  %408 = vmatpush1.msra.mxu0 0.0
  %409 = vmatprep.subr.mxu0 0.0
  %410 = vmatpush1.msra.mxu0 0.0
  %411 = vmatprep.subr.mxu0 0.0
  %412 = vmatpush1.msra.mxu0 0.0
  %413 = vmatprep.subr.mxu0 0.0
  %414 = vmatpush1.msra.mxu0 0.0
  %415 = vmatprep.subr.mxu0 0.0
  %416 = vmatpush1.msra.mxu0 0.0
  %417 = vmatprep.subr.mxu0 0.0
  %418 = vmatpush1.msra.mxu0 0.0
  %419 = vmatprep.subr.mxu0 0.0
  %420 = vmatpush1.msra.mxu0 0.0
  %421 = vmatprep.subr.mxu0 0.0
  %422 = vmatpush1.msra.mxu0 0.0
  %423 = vmatprep.subr.mxu0 0.0
  %424 = vmatpush1.msra.mxu0 0.0
  %425 = vmatprep.subr.mxu0 0.0
  %426 = vmatpush1.msra.mxu0 0.0
  %427 = vmatprep.subr.mxu0 0.0
  %428 = vmatpush1.msra.mxu0 0.0
  %429 = vmatprep.subr.mxu0 0.0
  %430 = vmatpush1.msra.mxu0 0.0
  %431 = vmatprep.subr.mxu0 0.0
  %432 = vmatpush1.msra.mxu0 0.0
  %433 = vmatprep.subr.mxu0 0.0
  %434 = vmatpush1.msra.mxu0 0.0
  %435 = vmatprep.mubr.f32.mxu0 0.0
  %436 = vmatmul.mubr.f32.gmra.mrb[0].mxu0 %v340
  %v437 = vpop.f32.mrb[0].mxu0
  %v438 = vadd.f32 %v369, %v437
  %v439 = vpop.f32.mrb[0].mxu0
  %440 = vmatprep.mubr.f32.mxu0 0.0
  %441 = vmatmul.mubr.f32.gmra.mrb[0].mxu0 %v341
  %v442 = vpop.f32.mrb[0].mxu0
  %v443 = vadd.f32 %v369, %v442
  %v444 = vpop.f32.mrb[0].mxu0
  %445 = vmatprep.mubr.f32.mxu0 0.0
  %446 = vmatmul.mubr.f32.gmra.mrb[0].mxu0 %v342
  %v447 = vpop.f32.mrb[0].mxu0
  %v448 = vadd.f32 %v369, %v447
  %v449 = vpop.f32.mrb[0].mxu0
  %450 = vmatprep.mubr.f32.mxu0 0.0
  %451 = vmatmul.mubr.f32.gmra.mrb[0].mxu0 %v343
  %v452 = vpop.f32.mrb[0].mxu0
  %v453 = vadd.f32 %v369, %v452
  %v454 = vpop.f32.mrb[0].mxu0
  %455 = vmatprep.mubr.f32.mxu0 0.0
  %456 = vmatmul.mubr.f32.gmra.mrb[0].mxu0 %v344
  %v457 = vpop.f32.mrb[0].mxu0
  %v458 = vadd.f32 %v369, %v457
  %v459 = vpop.f32.mrb[0].mxu0
  %460 = vmatprep.mubr.f32.mxu0 0.0
  %461 = vmatmul.mubr.f32.gmra.mrb[0].mxu0 %v345
  %v462 = vpop.f32.mrb[0].mxu0
  %v463 = vadd.f32 %v369, %v462
  %v464 = vpop.f32.mrb[0].mxu0
  %465 = vmatprep.mubr.f32.mxu0 0.0
  %466 = vmatmul.mubr.f32.gmra.mrb[0].mxu0 %v346
  %v467 = vpop.f32.mrb[0].mxu0
  %v468 = vadd.f32 %v369, %v467
  %v469 = vpop.f32.mrb[0].mxu0
  %470 = vmatprep.mubr.f32.mxu0 0.0
  %471 = vmatmul.mubr.f32.gmra.mrb[0].mxu0 %v347
  %v472 = vpop.f32.mrb[0].mxu0
  %v473 = vadd.f32 %v369, %v472
  %v474 = vpop.f32.mrb[0].mxu0
  %475 = vdwg.mxu0
  %vm476 = vcmp.gt.f32.partialorder %v438, 0.0
  %vm477 = vcmp.gt.f32.partialorder %v443, 0.0
  %vm478 = vcmp.gt.f32.partialorder %v448, 0.0
  %vm479 = vcmp.gt.f32.partialorder %v453, 0.0
  %vm480 = vcmp.gt.f32.partialorder %v458, 0.0
  %vm481 = vcmp.gt.f32.partialorder %v463, 0.0
  %vm482 = vcmp.gt.f32.partialorder %v468, 0.0
  %vm483 = vcmp.gt.f32.partialorder %v473, 0.0
  %v484 = vmul.f32 %v438, 0.01
  %v485 = vmul.f32 %v443, 0.01
  %v486 = vmul.f32 %v448, 0.01
  %v487 = vmul.f32 %v453, 0.01
  %v488 = vmul.f32 %v458, 0.01
  %v489 = vmul.f32 %v463, 0.01
  %v490 = vmul.f32 %v468, 0.01
  %v491 = vmul.f32 %v473, 0.01
  %v492 = vsel %vm476, %v438, %v484
  %v493 = vsel %vm477, %v443, %v485
  %v494 = vsel %vm478, %v448, %v486
  %v495 = vsel %vm479, %v453, %v487
  %v496 = vsel %vm480, %v458, %v488
  %v497 = vsel %vm481, %v463, %v489
  %v498 = vsel %vm482, %v468, %v490
  %v499 = vsel %vm483, %v473, %v491
  %v500 = vld [vmem:[%s7] sm:$0xff]
  %v501 = vld [vmem:[%s7 + $0x8] sm:$0xff]
  %v502 = vld [vmem:[%s7 + $0x10] sm:$0xff]
  %v503 = vld [vmem:[%s7 + $0x18] sm:$0xff]
  %v504 = vld [vmem:[%s7 + $0x20] sm:$0xff]
  %v505 = vld [vmem:[%s7 + $0x28] sm:$0xff]
  %v506 = vld [vmem:[%s7 + $0x30] sm:$0xff]
  %v507 = vld [vmem:[%s7 + $0x38] sm:$0xff]
  %v508 = vld [vmem:[%s7 + $0x40] sm:$0xff]
  %v509 = vld [vmem:[%s7 + $0x48] sm:$0xff]
  %v510 = vld [vmem:[%s7 + $0x50] sm:$0xff]
  %v511 = vld [vmem:[%s7 + $0x58] sm:$0xff]
  %v512 = vld [vmem:[%s7 + $0x60] sm:$0xff]
  %v513 = vld [vmem:[%s7 + $0x68] sm:$0xff]
  %v514 = vld [vmem:[%s7 + $0x70] sm:$0xff]
  %v515 = vld [vmem:[%s7 + $0x78] sm:$0xff]
  %v516 = vld [vmem:[%s8] sm:$0x1]
  %v518 = vlaneseq
  %v519 = vshrl.u32 %v518, 7
  %v520 = vsub.s32 0, %v519
  %v521 = vrot.slane %v516, %v520
  %523 = vmatprep.subr.mxu0 0.0
  %524 = vmatpush1.msra.mxu0 %v500
  %525 = vmatprep.subr.mxu0 0.0
  %526 = vmatpush1.msra.mxu0 %v501
  %527 = vmatprep.subr.mxu0 0.0
  %528 = vmatpush1.msra.mxu0 %v502
  %529 = vmatprep.subr.mxu0 0.0
  %530 = vmatpush1.msra.mxu0 %v503
  %531 = vmatprep.subr.mxu0 0.0
  %532 = vmatpush1.msra.mxu0 %v504
  %533 = vmatprep.subr.mxu0 0.0
  %534 = vmatpush1.msra.mxu0 %v505
  %535 = vmatprep.subr.mxu0 0.0
  %536 = vmatpush1.msra.mxu0 %v506
  %537 = vmatprep.subr.mxu0 0.0
  %538 = vmatpush1.msra.mxu0 %v507
  %539 = vmatprep.subr.mxu0 0.0
  %540 = vmatpush1.msra.mxu0 %v508
  %541 = vmatprep.subr.mxu0 0.0
  %542 = vmatpush1.msra.mxu0 %v509
  %543 = vmatprep.subr.mxu0 0.0
  %544 = vmatpush1.msra.mxu0 %v510
  %545 = vmatprep.subr.mxu0 0.0
  %546 = vmatpush1.msra.mxu0 %v511
  %547 = vmatprep.subr.mxu0 0.0
  %548 = vmatpush1.msra.mxu0 %v512
  %549 = vmatprep.subr.mxu0 0.0
  %550 = vmatpush1.msra.mxu0 %v513
  %551 = vmatprep.subr.mxu0 0.0
  %552 = vmatpush1.msra.mxu0 %v514
  %553 = vmatprep.subr.mxu0 0.0
  %554 = vmatpush1.msra.mxu0 %v515
  %555 = vmatprep.subr.mxu0 0.0
  %556 = vmatpush1.msra.mxu0 0.0
  %557 = vmatprep.subr.mxu0 0.0
  %558 = vmatpush1.msra.mxu0 0.0
  %559 = vmatprep.subr.mxu0 0.0
  %560 = vmatpush1.msra.mxu0 0.0
  %561 = vmatprep.subr.mxu0 0.0
  %562 = vmatpush1.msra.mxu0 0.0
  %563 = vmatprep.subr.mxu0 0.0
  %564 = vmatpush1.msra.mxu0 0.0
  %565 = vmatprep.subr.mxu0 0.0
  %566 = vmatpush1.msra.mxu0 0.0
  %567 = vmatprep.subr.mxu0 0.0
  %568 = vmatpush1.msra.mxu0 0.0
  %569 = vmatprep.subr.mxu0 0.0
  %570 = vmatpush1.msra.mxu0 0.0
  %571 = vmatprep.subr.mxu0 0.0
  %572 = vmatpush1.msra.mxu0 0.0
  %573 = vmatprep.subr.mxu0 0.0
  %574 = vmatpush1.msra.mxu0 0.0
  %575 = vmatprep.subr.mxu0 0.0
  %576 = vmatpush1.msra.mxu0 0.0
  %577 = vmatprep.subr.mxu0 0.0
  %578 = vmatpush1.msra.mxu0 0.0
  %579 = vmatprep.subr.mxu0 0.0
  %580 = vmatpush1.msra.mxu0 0.0
  %581 = vmatprep.subr.mxu0 0.0
  %582 = vmatpush1.msra.mxu0 0.0
  %583 = vmatprep.subr.mxu0 0.0
  %584 = vmatpush1.msra.mxu0 0.0
  %585 = vmatprep.subr.mxu0 0.0
  %586 = vmatpush1.msra.mxu0 0.0
  %587 = vmatprep.mubr.f32.mxu0 0.0
  %588 = vmatmul.mubr.f32.gmra.mrb[0].mxu0 %v492
  %v589 = vpop.f32.mrb[0].mxu0
  %v590 = vadd.f32 %v521, %v589
  %v591 = vpop.f32.mrb[0].mxu0
  %592 = vmatprep.mubr.f32.mxu0 0.0
  %593 = vmatmul.mubr.f32.gmra.mrb[0].mxu0 %v493
  %v594 = vpop.f32.mrb[0].mxu0
  %v595 = vadd.f32 %v521, %v594
  %v596 = vpop.f32.mrb[0].mxu0
  %597 = vmatprep.mubr.f32.mxu0 0.0
  %598 = vmatmul.mubr.f32.gmra.mrb[0].mxu0 %v494
  %v599 = vpop.f32.mrb[0].mxu0
  %v600 = vadd.f32 %v521, %v599
  %v601 = vpop.f32.mrb[0].mxu0
  %602 = vmatprep.mubr.f32.mxu0 0.0
  %603 = vmatmul.mubr.f32.gmra.mrb[0].mxu0 %v495
  %v604 = vpop.f32.mrb[0].mxu0
  %v605 = vadd.f32 %v521, %v604
  %v606 = vpop.f32.mrb[0].mxu0
  %607 = vmatprep.mubr.f32.mxu0 0.0
  %608 = vmatmul.mubr.f32.gmra.mrb[0].mxu0 %v496
  %v609 = vpop.f32.mrb[0].mxu0
  %v610 = vadd.f32 %v521, %v609
  %v611 = vpop.f32.mrb[0].mxu0
  %612 = vmatprep.mubr.f32.mxu0 0.0
  %613 = vmatmul.mubr.f32.gmra.mrb[0].mxu0 %v497
  %v614 = vpop.f32.mrb[0].mxu0
  %v615 = vadd.f32 %v521, %v614
  %v616 = vpop.f32.mrb[0].mxu0
  %617 = vmatprep.mubr.f32.mxu0 0.0
  %618 = vmatmul.mubr.f32.gmra.mrb[0].mxu0 %v498
  %v619 = vpop.f32.mrb[0].mxu0
  %v620 = vadd.f32 %v521, %v619
  %v621 = vpop.f32.mrb[0].mxu0
  %622 = vmatprep.mubr.f32.mxu0 0.0
  %623 = vmatmul.mubr.f32.gmra.mrb[0].mxu0 %v499
  %v624 = vpop.f32.mrb[0].mxu0
  %v625 = vadd.f32 %v521, %v624
  %v626 = vpop.f32.mrb[0].mxu0
  %627 = vdwg.mxu0
  %vm628 = vcmp.gt.f32.partialorder %v590, 0.0
  %vm629 = vcmp.gt.f32.partialorder %v595, 0.0
  %vm630 = vcmp.gt.f32.partialorder %v600, 0.0
  %vm631 = vcmp.gt.f32.partialorder %v605, 0.0
  %vm632 = vcmp.gt.f32.partialorder %v610, 0.0
  %vm633 = vcmp.gt.f32.partialorder %v615, 0.0
  %vm634 = vcmp.gt.f32.partialorder %v620, 0.0
  %vm635 = vcmp.gt.f32.partialorder %v625, 0.0
  %v636 = vmul.f32 %v590, 0.01
  %v637 = vmul.f32 %v595, 0.01
  %v638 = vmul.f32 %v600, 0.01
  %v639 = vmul.f32 %v605, 0.01
  %v640 = vmul.f32 %v610, 0.01
  %v641 = vmul.f32 %v615, 0.01
  %v642 = vmul.f32 %v620, 0.01
  %v643 = vmul.f32 %v625, 0.01
  %v644 = vsel %vm628, %v590, %v636
  %v645 = vsel %vm629, %v595, %v637
  %v646 = vsel %vm630, %v600, %v638
  %v647 = vsel %vm631, %v605, %v639
  %v648 = vsel %vm632, %v610, %v640
  %v649 = vsel %vm633, %v615, %v641
  %v650 = vsel %vm634, %v620, %v642
  %v651 = vsel %vm635, %v625, %v643
  %v652 = vld [vmem:[%s9] sm:$0xff]
  %v653 = vld [vmem:[%s9 + $0x8] sm:$0xff]
  %v654 = vld [vmem:[%s9 + $0x10] sm:$0xff]
  %v655 = vld [vmem:[%s9 + $0x18] sm:$0xff]
  %v656 = vld [vmem:[%s9 + $0x20] sm:$0xff]
  %v657 = vld [vmem:[%s9 + $0x28] sm:$0xff]
  %v658 = vld [vmem:[%s9 + $0x30] sm:$0xff]
  %v659 = vld [vmem:[%s9 + $0x38] sm:$0xff]
  %v660 = vld [vmem:[%s9 + $0x40] sm:$0xff]
  %v661 = vld [vmem:[%s9 + $0x48] sm:$0xff]
  %v662 = vld [vmem:[%s9 + $0x50] sm:$0xff]
  %v663 = vld [vmem:[%s9 + $0x58] sm:$0xff]
  %v664 = vld [vmem:[%s9 + $0x60] sm:$0xff]
  %v665 = vld [vmem:[%s9 + $0x68] sm:$0xff]
  %v666 = vld [vmem:[%s9 + $0x70] sm:$0xff]
  %v667 = vld [vmem:[%s9 + $0x78] sm:$0xff]
  %v668 = vld [vmem:[%s10] sm:$0x1]
  %v670 = vlaneseq
  %v671 = vshrl.u32 %v670, 7
  %v672 = vsub.s32 0, %v671
  %v673 = vrot.slane %v668, %v672
  %675 = vmatprep.subr.mxu0 0.0
  %676 = vmatpush1.msra.mxu0 %v652
  %677 = vmatprep.subr.mxu0 0.0
  %678 = vmatpush1.msra.mxu0 %v653
  %679 = vmatprep.subr.mxu0 0.0
  %680 = vmatpush1.msra.mxu0 %v654
  %681 = vmatprep.subr.mxu0 0.0
  %682 = vmatpush1.msra.mxu0 %v655
  %683 = vmatprep.subr.mxu0 0.0
  %684 = vmatpush1.msra.mxu0 %v656
  %685 = vmatprep.subr.mxu0 0.0
  %686 = vmatpush1.msra.mxu0 %v657
  %687 = vmatprep.subr.mxu0 0.0
  %688 = vmatpush1.msra.mxu0 %v658
  %689 = vmatprep.subr.mxu0 0.0
  %690 = vmatpush1.msra.mxu0 %v659
  %691 = vmatprep.subr.mxu0 0.0
  %692 = vmatpush1.msra.mxu0 %v660
  %693 = vmatprep.subr.mxu0 0.0
  %694 = vmatpush1.msra.mxu0 %v661
  %695 = vmatprep.subr.mxu0 0.0
  %696 = vmatpush1.msra.mxu0 %v662
  %697 = vmatprep.subr.mxu0 0.0
  %698 = vmatpush1.msra.mxu0 %v663
  %699 = vmatprep.subr.mxu0 0.0
  %700 = vmatpush1.msra.mxu0 %v664
  %701 = vmatprep.subr.mxu0 0.0
  %702 = vmatpush1.msra.mxu0 %v665
  %703 = vmatprep.subr.mxu0 0.0
  %704 = vmatpush1.msra.mxu0 %v666
  %705 = vmatprep.subr.mxu0 0.0
  %706 = vmatpush1.msra.mxu0 %v667
  %707 = vmatprep.subr.mxu0 0.0
  %708 = vmatpush1.msra.mxu0 0.0
  %709 = vmatprep.subr.mxu0 0.0
  %710 = vmatpush1.msra.mxu0 0.0
  %711 = vmatprep.subr.mxu0 0.0
  %712 = vmatpush1.msra.mxu0 0.0
  %713 = vmatprep.subr.mxu0 0.0
  %714 = vmatpush1.msra.mxu0 0.0
  %715 = vmatprep.subr.mxu0 0.0
  %716 = vmatpush1.msra.mxu0 0.0
  %717 = vmatprep.subr.mxu0 0.0
  %718 = vmatpush1.msra.mxu0 0.0
  %719 = vmatprep.subr.mxu0 0.0
  %720 = vmatpush1.msra.mxu0 0.0
  %721 = vmatprep.subr.mxu0 0.0
  %722 = vmatpush1.msra.mxu0 0.0
  %723 = vmatprep.subr.mxu0 0.0
  %724 = vmatpush1.msra.mxu0 0.0
  %725 = vmatprep.subr.mxu0 0.0
  %726 = vmatpush1.msra.mxu0 0.0
  %727 = vmatprep.subr.mxu0 0.0
  %728 = vmatpush1.msra.mxu0 0.0
  %729 = vmatprep.subr.mxu0 0.0
  %730 = vmatpush1.msra.mxu0 0.0
  %731 = vmatprep.subr.mxu0 0.0
  %732 = vmatpush1.msra.mxu0 0.0
  %733 = vmatprep.subr.mxu0 0.0
  %734 = vmatpush1.msra.mxu0 0.0
  %735 = vmatprep.subr.mxu0 0.0
  %736 = vmatpush1.msra.mxu0 0.0
  %737 = vmatprep.subr.mxu0 0.0
  %738 = vmatpush1.msra.mxu0 0.0
  %739 = vmatprep.mubr.f32.mxu0 0.0
  %740 = vmatmul.mubr.f32.gmra.mrb[0].mxu0 %v644
  %v741 = vpop.f32.mrb[0].mxu0
  %v742 = vadd.f32 %v673, %v741
  %v743 = vpop.f32.mrb[0].mxu0
  %744 = vmatprep.mubr.f32.mxu0 0.0
  %745 = vmatmul.mubr.f32.gmra.mrb[0].mxu0 %v645
  %v746 = vpop.f32.mrb[0].mxu0
  %v747 = vadd.f32 %v673, %v746
  %v748 = vpop.f32.mrb[0].mxu0
  %749 = vmatprep.mubr.f32.mxu0 0.0
  %750 = vmatmul.mubr.f32.gmra.mrb[0].mxu0 %v646
  %v751 = vpop.f32.mrb[0].mxu0
  %v752 = vadd.f32 %v673, %v751
  %v753 = vpop.f32.mrb[0].mxu0
  %754 = vmatprep.mubr.f32.mxu0 0.0
  %755 = vmatmul.mubr.f32.gmra.mrb[0].mxu0 %v647
  %v756 = vpop.f32.mrb[0].mxu0
  %v757 = vadd.f32 %v673, %v756
  %v758 = vpop.f32.mrb[0].mxu0
  %759 = vmatprep.mubr.f32.mxu0 0.0
  %760 = vmatmul.mubr.f32.gmra.mrb[0].mxu0 %v648
  %v761 = vpop.f32.mrb[0].mxu0
  %v762 = vadd.f32 %v673, %v761
  %v763 = vpop.f32.mrb[0].mxu0
  %764 = vmatprep.mubr.f32.mxu0 0.0
  %765 = vmatmul.mubr.f32.gmra.mrb[0].mxu0 %v649
  %v766 = vpop.f32.mrb[0].mxu0
  %v767 = vadd.f32 %v673, %v766
  %v768 = vpop.f32.mrb[0].mxu0
  %769 = vmatprep.mubr.f32.mxu0 0.0
  %770 = vmatmul.mubr.f32.gmra.mrb[0].mxu0 %v650
  %v771 = vpop.f32.mrb[0].mxu0
  %v772 = vadd.f32 %v673, %v771
  %v773 = vpop.f32.mrb[0].mxu0
  %774 = vmatprep.mubr.f32.mxu0 0.0
  %775 = vmatmul.mubr.f32.gmra.mrb[0].mxu0 %v651
  %v776 = vpop.f32.mrb[0].mxu0
  %v777 = vadd.f32 %v673, %v776
  %v778 = vpop.f32.mrb[0].mxu0
  %779 = vdwg.mxu0
  %vm780 = vcmp.gt.f32.partialorder %v742, 0.0
  %vm781 = vcmp.gt.f32.partialorder %v747, 0.0
  %vm782 = vcmp.gt.f32.partialorder %v752, 0.0
  %vm783 = vcmp.gt.f32.partialorder %v757, 0.0
  %vm784 = vcmp.gt.f32.partialorder %v762, 0.0
  %vm785 = vcmp.gt.f32.partialorder %v767, 0.0
  %vm786 = vcmp.gt.f32.partialorder %v772, 0.0
  %vm787 = vcmp.gt.f32.partialorder %v777, 0.0
  %v788 = vmul.f32 %v742, 0.01
  %v789 = vmul.f32 %v747, 0.01
  %v790 = vmul.f32 %v752, 0.01
  %v791 = vmul.f32 %v757, 0.01
  %v792 = vmul.f32 %v762, 0.01
  %v793 = vmul.f32 %v767, 0.01
  %v794 = vmul.f32 %v772, 0.01
  %v795 = vmul.f32 %v777, 0.01
  %v796 = vsel %vm780, %v742, %v788
  %v797 = vsel %vm781, %v747, %v789
  %v798 = vsel %vm782, %v752, %v790
  %v799 = vsel %vm783, %v757, %v791
  %v800 = vsel %vm784, %v762, %v792
  %v801 = vsel %vm785, %v767, %v793
  %v802 = vsel %vm786, %v772, %v794
  %v803 = vsel %vm787, %v777, %v795
  %v804 = vld [vmem:[%s11] sm:$0xff]
  %v805 = vld [vmem:[%s11 + $0x8] sm:$0xff]
  %v806 = vld [vmem:[%s11 + $0x10] sm:$0xff]
  %v807 = vld [vmem:[%s11 + $0x18] sm:$0xff]
  %v808 = vld [vmem:[%s11 + $0x20] sm:$0xff]
  %v809 = vld [vmem:[%s11 + $0x28] sm:$0xff]
  %v810 = vld [vmem:[%s11 + $0x30] sm:$0xff]
  %v811 = vld [vmem:[%s11 + $0x38] sm:$0xff]
  %v812 = vld [vmem:[%s11 + $0x40] sm:$0xff]
  %v813 = vld [vmem:[%s11 + $0x48] sm:$0xff]
  %v814 = vld [vmem:[%s11 + $0x50] sm:$0xff]
  %v815 = vld [vmem:[%s11 + $0x58] sm:$0xff]
  %v816 = vld [vmem:[%s11 + $0x60] sm:$0xff]
  %v817 = vld [vmem:[%s11 + $0x68] sm:$0xff]
  %v818 = vld [vmem:[%s11 + $0x70] sm:$0xff]
  %v819 = vld [vmem:[%s11 + $0x78] sm:$0xff]
  %v820 = vld [vmem:[%s12] sm:$0x1]
  %v822 = vlaneseq
  %v823 = vshrl.u32 %v822, 7
  %v824 = vsub.s32 0, %v823
  %v825 = vrot.slane %v820, %v824
  %827 = vmatprep.subr.mxu0 0.0
  %828 = vmatpush1.msra.mxu0 %v804
  %829 = vmatprep.subr.mxu0 0.0
  %830 = vmatpush1.msra.mxu0 %v805
  %831 = vmatprep.subr.mxu0 0.0
  %832 = vmatpush1.msra.mxu0 %v806
  %833 = vmatprep.subr.mxu0 0.0
  %834 = vmatpush1.msra.mxu0 %v807
  %835 = vmatprep.subr.mxu0 0.0
  %836 = vmatpush1.msra.mxu0 %v808
  %837 = vmatprep.subr.mxu0 0.0
  %838 = vmatpush1.msra.mxu0 %v809
  %839 = vmatprep.subr.mxu0 0.0
  %840 = vmatpush1.msra.mxu0 %v810
  %841 = vmatprep.subr.mxu0 0.0
  %842 = vmatpush1.msra.mxu0 %v811
  %843 = vmatprep.subr.mxu0 0.0
  %844 = vmatpush1.msra.mxu0 %v812
  %845 = vmatprep.subr.mxu0 0.0
  %846 = vmatpush1.msra.mxu0 %v813
  %847 = vmatprep.subr.mxu0 0.0
  %848 = vmatpush1.msra.mxu0 %v814
  %849 = vmatprep.subr.mxu0 0.0
  %850 = vmatpush1.msra.mxu0 %v815
  %851 = vmatprep.subr.mxu0 0.0
  %852 = vmatpush1.msra.mxu0 %v816
  %853 = vmatprep.subr.mxu0 0.0
  %854 = vmatpush1.msra.mxu0 %v817
  %855 = vmatprep.subr.mxu0 0.0
  %856 = vmatpush1.msra.mxu0 %v818
  %857 = vmatprep.subr.mxu0 0.0
  %858 = vmatpush1.msra.mxu0 %v819
  %859 = vmatprep.subr.mxu0 0.0
  %860 = vmatpush1.msra.mxu0 0.0
  %861 = vmatprep.subr.mxu0 0.0
  %862 = vmatpush1.msra.mxu0 0.0
  %863 = vmatprep.subr.mxu0 0.0
  %864 = vmatpush1.msra.mxu0 0.0
  %865 = vmatprep.subr.mxu0 0.0
  %866 = vmatpush1.msra.mxu0 0.0
  %867 = vmatprep.subr.mxu0 0.0
  %868 = vmatpush1.msra.mxu0 0.0
  %869 = vmatprep.subr.mxu0 0.0
  %870 = vmatpush1.msra.mxu0 0.0
  %871 = vmatprep.subr.mxu0 0.0
  %872 = vmatpush1.msra.mxu0 0.0
  %873 = vmatprep.subr.mxu0 0.0
  %874 = vmatpush1.msra.mxu0 0.0
  %875 = vmatprep.subr.mxu0 0.0
  %876 = vmatpush1.msra.mxu0 0.0
  %877 = vmatprep.subr.mxu0 0.0
  %878 = vmatpush1.msra.mxu0 0.0
  %879 = vmatprep.subr.mxu0 0.0
  %880 = vmatpush1.msra.mxu0 0.0
  %881 = vmatprep.subr.mxu0 0.0
  %882 = vmatpush1.msra.mxu0 0.0
  %883 = vmatprep.subr.mxu0 0.0
  %884 = vmatpush1.msra.mxu0 0.0
  %885 = vmatprep.subr.mxu0 0.0
  %886 = vmatpush1.msra.mxu0 0.0
  %887 = vmatprep.subr.mxu0 0.0
  %888 = vmatpush1.msra.mxu0 0.0
  %889 = vmatprep.subr.mxu0 0.0
  %890 = vmatpush1.msra.mxu0 0.0
  %891 = vmatprep.mubr.f32.mxu0 0.0
  %892 = vmatmul.mubr.f32.gmra.mrb[0].mxu0 %v796
  %v893 = vpop.f32.mrb[0].mxu0
  %v894 = vadd.f32 %v825, %v893
  %v895 = vpop.f32.mrb[0].mxu0
  %896 = vmatprep.mubr.f32.mxu0 0.0
  %897 = vmatmul.mubr.f32.gmra.mrb[0].mxu0 %v797
  %v898 = vpop.f32.mrb[0].mxu0
  %v899 = vadd.f32 %v825, %v898
  %v900 = vpop.f32.mrb[0].mxu0
  %901 = vmatprep.mubr.f32.mxu0 0.0
  %902 = vmatmul.mubr.f32.gmra.mrb[0].mxu0 %v798
  %v903 = vpop.f32.mrb[0].mxu0
  %v904 = vadd.f32 %v825, %v903
  %v905 = vpop.f32.mrb[0].mxu0
  %906 = vmatprep.mubr.f32.mxu0 0.0
  %907 = vmatmul.mubr.f32.gmra.mrb[0].mxu0 %v799
  %v908 = vpop.f32.mrb[0].mxu0
  %v909 = vadd.f32 %v825, %v908
  %v910 = vpop.f32.mrb[0].mxu0
  %911 = vmatprep.mubr.f32.mxu0 0.0
  %912 = vmatmul.mubr.f32.gmra.mrb[0].mxu0 %v800
  %v913 = vpop.f32.mrb[0].mxu0
  %v914 = vadd.f32 %v825, %v913
  %v915 = vpop.f32.mrb[0].mxu0
  %916 = vmatprep.mubr.f32.mxu0 0.0
  %917 = vmatmul.mubr.f32.gmra.mrb[0].mxu0 %v801
  %v918 = vpop.f32.mrb[0].mxu0
  %v919 = vadd.f32 %v825, %v918
  %v920 = vpop.f32.mrb[0].mxu0
  %921 = vmatprep.mubr.f32.mxu0 0.0
  %922 = vmatmul.mubr.f32.gmra.mrb[0].mxu0 %v802
  %v923 = vpop.f32.mrb[0].mxu0
  %v924 = vadd.f32 %v825, %v923
  %v925 = vpop.f32.mrb[0].mxu0
  %926 = vmatprep.mubr.f32.mxu0 0.0
  %927 = vmatmul.mubr.f32.gmra.mrb[0].mxu0 %v803
  %v928 = vpop.f32.mrb[0].mxu0
  %v929 = vadd.f32 %v825, %v928
  %v930 = vpop.f32.mrb[0].mxu0
  %931 = vdwg.mxu0
  %vm932 = vcmask 15360
  %933 = vst.msk [vmem:[%s13] sm:$0xff] %vm932, %v894
  %934 = vst.msk [vmem:[%s13 + $0x8] sm:$0xff] %vm932, %v899
  %935 = vst.msk [vmem:[%s13 + $0x10] sm:$0xff] %vm932, %v904
  %936 = vst.msk [vmem:[%s13 + $0x18] sm:$0xff] %vm932, %v909
  %937 = vst.msk [vmem:[%s13 + $0x20] sm:$0xff] %vm932, %v914
  %938 = vst.msk [vmem:[%s13 + $0x28] sm:$0xff] %vm932, %v919
  %939 = vst.msk [vmem:[%s13 + $0x30] sm:$0xff] %vm932, %v924
  %940 = vst.msk [vmem:[%s13 + $0x38] sm:$0xff] %vm932, %v929
  // Predicated region
  $region54: #{mlp_forward.1} parent=0 // pred_check
    _
  $region55: #{mlp_forward.1} parent=0 // pred_check_branch
    %942 = sbr.rel (0) target = $region57
  $region56: #{mlp_forward.1} parent=0 // pred_region
    _
  $region57: #{mlp_forward.1} parent=0 // pred_fallthru
    _
  // Predicated region
  $region58: #{mlp_forward.1} parent=0 // pred_check
    _
  $region59: #{mlp_forward.1} parent=0 // pred_check_branch
    %944 = sbr.rel (0) target = $region61
  $region60: #{mlp_forward.1} parent=0 // pred_region
    _
  $region61: #{mlp_forward.1} parent=0 // pred_fallthru
    _

</llo_original>
